<compile_context>
chip_gen: v7x
topology: tpu7x:2x2x1
jax: 0.10.0
libtpu: 0.0.40
codegen_flags: <defaults>
</compile_context>

<pallas_src>
import jax
import jax.numpy as jnp
from jax.experimental import pallas as pl
from jax.experimental.pallas import tpu as pltpu


# --------------------------------------------------------------------------- #
# Kernel
# --------------------------------------------------------------------------- #
def _make_mlp_kernel(n_layers):
    """Fused n-layer MLP.  Each layer: y = x @ W + b ; ReLU (incl. final layer).
    Dot operands are whatever dtype the wrapper chose for the weights (bf16 by
    default) -> MXU; accumulation is f32 (preferred_element_type); bias-add and
    ReLU run in f32 on the VPU.  Intermediate activations are stored in the
    compute dtype, the last layer stays f32 until the (narrow) output store."""

    def kernel(*refs):
        x_ref = refs[0]
        o_ref = refs[-1]
        h = x_ref[...]                                   # f32 straight from HBM
        for i in range(n_layers):
            w_ref = refs[1 + 2 * i]
            b_ref = refs[2 + 2 * i]
            y = jnp.dot(h.astype(w_ref.dtype), w_ref[...],
                        preferred_element_type=jnp.float32)
            y = jnp.maximum(y + b_ref[...], 0.0)          # bias + ReLU in f32
            if i < n_layers - 1:
                y = y.astype(w_ref.dtype)                 # bf16 intermediates
            h = y
        # Store only the real output columns (lane-padded compute stays in VMEM).
        o_ref[...] = h[:, :o_ref.shape[1]].astype(o_ref.dtype)

    return kernel


# --------------------------------------------------------------------------- #
# Wrapper
# --------------------------------------------------------------------------- #
def _round_up(n, m):
    return ((n + m - 1) // m) * m


def _cdiv(a, b):
    return (a + b - 1) // b


def _pad_params(params, lane_pad=128):
    """Zero-pad layer output dims (and matching next-layer input dims) to a
    multiple of `lane_pad` so every intermediate activation is lane-dense for
    the MXU.  Padded lanes stay exactly 0 through bias-add + ReLU, so numerics
    are unchanged.  The network's true input dim is left untouched."""
    padded = []
    prev_in = params[0][0].shape[0]
    for (w, b) in params:
        d_in, d_out = w.shape
        out_p = _round_up(d_out, lane_pad)
        w_p = jnp.zeros((prev_in, out_p), w.dtype).at[:d_in, :d_out].set(w)
        b_p = jnp.zeros((1, out_p), b.dtype).at[:, :d_out].set(b)
        padded.append((w_p, b_p))
        prev_in = out_p
    return padded


def xtoc_forward(x, params, *, batch_tile=4096, compute_dtype=jnp.bfloat16,
                 lane_pad=128, min_split_rows=512):
    """x: [B, inputs] float32.  params: list of (W [in,out], b [1,out]) per layer
    (weights already transposed from PyTorch's [out,in])."""
    out_dtype = x.dtype
    B, in_dim = x.shape
    out_dim = params[-1][0].shape[1]
    n_layers = len(params)

    # Lane-dense (zero padded) weights for the MXU; compute stays 128-lane wide,
    # but the HBM output stays at the true out_dim.
    padded = _pad_params(params, lane_pad)

    # --- batch tiling ------------------------------------------------------ #
    # Big tiles by default, shrink for small batches.  No padding of x: the grid
    # uses cdiv, the ragged last block's extra rows are never written back.
    tile = min(_round_up(batch_tile, 8), _round_up(B, 8))
    grid = _cdiv(B, tile)
    # Guarantee >= 2 "parallel" steps for larger batches so both TensorCores on
    # v7x get work (harmless on single-TC v5e/v6e).
    if grid == 1 and B >= min_split_rows:
        tile = _round_up(_cdiv(_round_up(B, 8), 2), 8)
        grid = _cdiv(B, tile)

    # --- operands & specs --------------------------------------------------- #
    flat_params = []
    in_specs = [pl.BlockSpec((tile, in_dim), lambda i: (i, 0))]   # f32 x, cast in-kernel
    for (w, b) in padded:
        w_c = w.astype(compute_dtype)          # MXU operand dtype
        b_f = b.astype(jnp.float32)            # bias stays f32 (f32 VPU math)
        flat_params += [w_c, b_f]
        in_specs.append(pl.BlockSpec(w_c.shape, lambda i: (0, 0)))   # resident
        in_specs.append(pl.BlockSpec(b_f.shape, lambda i: (0, 0)))   # resident

    # Advisory cost estimate (real useful flops / bytes, not padded compute).
    flops = 2 * B * sum(w.shape[0] * w.shape[1] for (w, _) in params)
    bytes_accessed = int(
        B * in_dim * x.dtype.itemsize
        + sum(w.size * jnp.dtype(compute_dtype).itemsize + b.size * 4
              for (w, b) in padded)
        + B * out_dim * jnp.dtype(out_dtype).itemsize)

    out = pl.pallas_call(
        _make_mlp_kernel(n_layers),
        out_shape=jax.ShapeDtypeStruct((B, out_dim), out_dtype),
        grid_spec=pltpu.PrefetchScalarGridSpec(
            num_scalar_prefetch=0,
            grid=(grid,),
            in_specs=in_specs,
            out_specs=pl.BlockSpec((tile, out_dim), lambda i: (i, 0)),
        ),
        compiler_params=pltpu.CompilerParams(
            dimension_semantics=("parallel",)),
        cost_estimate=pl.CostEstimate(flops=flops, transcendentals=0,
                                      bytes_accessed=bytes_accessed),
    )(x, *flat_params)

    return out


# --------------------------------------------------------------------------- #
# Parameter construction + references
# --------------------------------------------------------------------------- #
def make_params(key, inputs, concepts, latents=0, depth=4, width=32):
    """Deterministic synthetic parameters matching XtoCModel.__init__ shapes.
    Weights stored as [in, out] (transposed from PyTorch's [out, in])."""
    params = []
    prev = inputs
    dims = []
    for i in range(depth):
        out = (concepts + latents) if i == depth - 1 else width
        dims.append((prev, out))
        prev = out
    keys = jax.random.split(key, 2 * depth)
    for i, (d_in, d_out) in enumerate(dims):
        scale = 1.0 / jnp.sqrt(jnp.float32(d_in))   # ~ PyTorch Linear default scale
        w = jax.random.uniform(keys[2 * i], (d_in, d_out), jnp.float32,
                               minval=-scale, maxval=scale)
        b = jax.random.uniform(keys[2 * i + 1], (1, d_out), jnp.float32,
                               minval=-scale, maxval=scale)
        params.append((w, b))
    return params


def reference_forward(x, params, compute_dtype=jnp.float32):
    """Pure-JAX reference; mirrors the kernel's dtype strategy when
    compute_dtype != f32 (bf16 dot operands, f32 accumulation & elementwise)."""
    h = x.astype(jnp.float32)
    for (w, b) in params:
        y = jnp.dot(h.astype(compute_dtype), w.astype(compute_dtype),
                    preferred_element_type=jnp.float32)
        h = jnp.maximum(y + b.astype(jnp.float32), 0.0)
    return h


# --------------------------------------------------------------------------- #
# Self-test
# --------------------------------------------------------------------------- #
if __name__ == "__main__":
    key = jax.random.PRNGKey(0)
    kx1, kx2, kx3, kp = jax.random.split(key, 4)

    inputs, concepts, latents, depth, width = 32, 4, 0, 4, 32
    out_dim = concepts + latents
    params = make_params(kp, inputs, concepts, latents, depth, width)

    # --- Test 1: bf16 path, ragged batch + multi-step parallel grid ---------- #
    batch1 = 100                                   # not a multiple of the tile
    x1 = jax.random.normal(kx1, (batch1, inputs), dtype=jnp.float32)
    out1 = jax.block_until_ready(xtoc_forward(x1, params, batch_tile=32,
                                              compute_dtype=jnp.bfloat16))
    assert out1.shape == (batch1, out_dim)
    ref1_bf16 = reference_forward(x1, params, compute_dtype=jnp.bfloat16)
    ref1_f32 = reference_forward(x1, params, compute_dtype=jnp.float32)
    assert jnp.allclose(out1, ref1_bf16, atol=1e-4, rtol=1e-4)   # same numerics
    assert jnp.allclose(out1, ref1_f32, atol=5e-2, rtol=5e-2)    # bf16 vs f32

    # --- Test 2: f32 path, tiny batch, tight tolerance ----------------------- #
    batch2 = 8
    x2 = jax.random.normal(kx2, (batch2, inputs), dtype=jnp.float32)
    out2 = jax.block_until_ready(xtoc_forward(x2, params,
                                              compute_dtype=jnp.float32))
    ref2 = reference_forward(x2, params, compute_dtype=jnp.float32)
    assert out2.shape == (batch2, out_dim)
    assert jnp.allclose(out2, ref2, atol=1e-5, rtol=1e-5)

    # --- Test 3: default tile, batch large enough to trigger the 2-way split - #
    batch3 = 600                                   # grid forced to 2 parallel steps
    x3 = jax.random.normal(kx3, (batch3, inputs), dtype=jnp.float32)
    out3 = jax.block_until_ready(xtoc_forward(x3, params))       # bf16 defaults
    ref3_bf16 = reference_forward(x3, params, compute_dtype=jnp.bfloat16)
    assert out3.shape == (batch3, out_dim)
    assert jnp.allclose(out3, ref3_bf16, atol=1e-4, rtol=1e-4)

    print("KERNEL_OK")
</pallas_src>

<mosaic_0001>
module attributes {stable_mosaic.version = 11 : i64} {
  func.func @kernel(%arg0: i32, %arg1: memref<32x32xf32, #tpu.memory_space<vmem>>, %arg2: memref<32x128xbf16, #tpu.memory_space<vmem>>, %arg3: memref<1x128xf32, #tpu.memory_space<vmem>>, %arg4: memref<128x128xbf16, #tpu.memory_space<vmem>>, %arg5: memref<1x128xf32, #tpu.memory_space<vmem>>, %arg6: memref<128x128xbf16, #tpu.memory_space<vmem>>, %arg7: memref<1x128xf32, #tpu.memory_space<vmem>>, %arg8: memref<128x128xbf16, #tpu.memory_space<vmem>>, %arg9: memref<1x128xf32, #tpu.memory_space<vmem>>, %arg10: memref<32x4xf32, #tpu.memory_space<vmem>>) attributes {dimension_semantics = [#tpu.dimension_semantics<parallel>], iteration_bounds = array<i64: 4>, scalar_prefetch = 0 : i64, scratch_operands = 0 : i64, tpu.core_type = #tpu.core_type<tc>, window_params = [{transform_indices = @transform_0, window_bounds = array<i64: 32, 32>}, {pipeline_mode = #tpu.pipeline_mode<synchronous>, transform_indices = @transform_1, window_bounds = array<i64: 32, 128>}, {pipeline_mode = #tpu.pipeline_mode<synchronous>, transform_indices = @transform_2, window_bounds = array<i64: 1, 128>}, {pipeline_mode = #tpu.pipeline_mode<synchronous>, transform_indices = @transform_3, window_bounds = array<i64: 128, 128>}, {pipeline_mode = #tpu.pipeline_mode<synchronous>, transform_indices = @transform_4, window_bounds = array<i64: 1, 128>}, {pipeline_mode = #tpu.pipeline_mode<synchronous>, transform_indices = @transform_5, window_bounds = array<i64: 128, 128>}, {pipeline_mode = #tpu.pipeline_mode<synchronous>, transform_indices = @transform_6, window_bounds = array<i64: 1, 128>}, {pipeline_mode = #tpu.pipeline_mode<synchronous>, transform_indices = @transform_7, window_bounds = array<i64: 128, 128>}, {pipeline_mode = #tpu.pipeline_mode<synchronous>, transform_indices = @transform_8, window_bounds = array<i64: 1, 128>}, {transform_indices = @transform_9, window_bounds = array<i64: 32, 4>}]} {
    %c0 = arith.constant 0 : index
    %c0_0 = arith.constant 0 : index
    %0 = vector.load %arg1[%c0, %c0_0] : memref<32x32xf32, #tpu.memory_space<vmem>>, vector<32x32xf32>
    %1 = arith.truncf %0 : vector<32x32xf32> to vector<32x32xbf16>
    %c0_1 = arith.constant 0 : index
    %c0_2 = arith.constant 0 : index
    %2 = vector.load %arg2[%c0_1, %c0_2] : memref<32x128xbf16, #tpu.memory_space<vmem>>, vector<32x128xbf16>
    %cst = arith.constant dense<0.000000e+00> : vector<32x128xf32>
    %3 = tpu.matmul %1, %2, %cst {dimension_numbers = #tpu.dot_dimension_numbers<[1], [0], [0], [1], [0, 0, 1, 1], [], []>} : vector<32x32xbf16>, vector<32x128xbf16>, vector<32x128xf32> -> vector<32x128xf32>
    %c0_3 = arith.constant 0 : index
    %c0_4 = arith.constant 0 : index
    %4 = vector.load %arg3[%c0_3, %c0_4] : memref<1x128xf32, #tpu.memory_space<vmem>>, vector<1x128xf32>
    %5 = vector.broadcast %4 : vector<1x128xf32> to vector<32x128xf32>
    %6 = arith.addf %3, %5 : vector<32x128xf32>
    %cst_5 = arith.constant 0.000000e+00 : f32
    %7 = vector.broadcast %cst_5 : f32 to vector<32x128xf32>
    %8 = arith.maximumf %6, %7 : vector<32x128xf32>
    %9 = arith.truncf %8 : vector<32x128xf32> to vector<32x128xbf16>
    %c0_6 = arith.constant 0 : index
    %c0_7 = arith.constant 0 : index
    %10 = vector.load %arg4[%c0_6, %c0_7] : memref<128x128xbf16, #tpu.memory_space<vmem>>, vector<128x128xbf16>
    %cst_8 = arith.constant dense<0.000000e+00> : vector<32x128xf32>
    %11 = tpu.matmul %9, %10, %cst_8 {dimension_numbers = #tpu.dot_dimension_numbers<[1], [0], [0], [1], [0, 0, 1, 1], [], []>} : vector<32x128xbf16>, vector<128x128xbf16>, vector<32x128xf32> -> vector<32x128xf32>
    %c0_9 = arith.constant 0 : index
    %c0_10 = arith.constant 0 : index
    %12 = vector.load %arg5[%c0_9, %c0_10] : memref<1x128xf32, #tpu.memory_space<vmem>>, vector<1x128xf32>
    %13 = vector.broadcast %12 : vector<1x128xf32> to vector<32x128xf32>
    %14 = arith.addf %11, %13 : vector<32x128xf32>
    %cst_11 = arith.constant 0.000000e+00 : f32
    %15 = vector.broadcast %cst_11 : f32 to vector<32x128xf32>
    %16 = arith.maximumf %14, %15 : vector<32x128xf32>
    %17 = arith.truncf %16 : vector<32x128xf32> to vector<32x128xbf16>
    %c0_12 = arith.constant 0 : index
    %c0_13 = arith.constant 0 : index
    %18 = vector.load %arg6[%c0_12, %c0_13] : memref<128x128xbf16, #tpu.memory_space<vmem>>, vector<128x128xbf16>
    %cst_14 = arith.constant dense<0.000000e+00> : vector<32x128xf32>
    %19 = tpu.matmul %17, %18, %cst_14 {dimension_numbers = #tpu.dot_dimension_numbers<[1], [0], [0], [1], [0, 0, 1, 1], [], []>} : vector<32x128xbf16>, vector<128x128xbf16>, vector<32x128xf32> -> vector<32x128xf32>
    %c0_15 = arith.constant 0 : index
    %c0_16 = arith.constant 0 : index
    %20 = vector.load %arg7[%c0_15, %c0_16] : memref<1x128xf32, #tpu.memory_space<vmem>>, vector<1x128xf32>
    %21 = vector.broadcast %20 : vector<1x128xf32> to vector<32x128xf32>
    %22 = arith.addf %19, %21 : vector<32x128xf32>
    %cst_17 = arith.constant 0.000000e+00 : f32
    %23 = vector.broadcast %cst_17 : f32 to vector<32x128xf32>
    %24 = arith.maximumf %22, %23 : vector<32x128xf32>
    %25 = arith.truncf %24 : vector<32x128xf32> to vector<32x128xbf16>
    %c0_18 = arith.constant 0 : index
    %c0_19 = arith.constant 0 : index
    %26 = vector.load %arg8[%c0_18, %c0_19] : memref<128x128xbf16, #tpu.memory_space<vmem>>, vector<128x128xbf16>
    %cst_20 = arith.constant dense<0.000000e+00> : vector<32x128xf32>
    %27 = tpu.matmul %25, %26, %cst_20 {dimension_numbers = #tpu.dot_dimension_numbers<[1], [0], [0], [1], [0, 0, 1, 1], [], []>} : vector<32x128xbf16>, vector<128x128xbf16>, vector<32x128xf32> -> vector<32x128xf32>
    %c0_21 = arith.constant 0 : index
    %c0_22 = arith.constant 0 : index
    %28 = vector.load %arg9[%c0_21, %c0_22] : memref<1x128xf32, #tpu.memory_space<vmem>>, vector<1x128xf32>
    %29 = vector.broadcast %28 : vector<1x128xf32> to vector<32x128xf32>
    %30 = arith.addf %27, %29 : vector<32x128xf32>
    %cst_23 = arith.constant 0.000000e+00 : f32
    %31 = vector.broadcast %cst_23 : f32 to vector<32x128xf32>
    %32 = arith.maximumf %30, %31 : vector<32x128xf32>
    %33 = vector.extract_strided_slice %32 {offsets = [0, 0], sizes = [32, 4], strides = [1, 1]} : vector<32x128xf32> to vector<32x4xf32>
    %c0_24 = arith.constant 0 : index
    %c0_25 = arith.constant 0 : index
    %34 = vector.load %arg10[%c0_24, %c0_25] : memref<32x4xf32, #tpu.memory_space<vmem>>, vector<32x4xf32>
    tpu.vector_store %arg10[%c0_24, %c0_25], %33 {strides = array<i32>} : memref<32x4xf32, #tpu.memory_space<vmem>>, vector<32x4xf32>,
    return
  }
  func.func @transform_0(%arg0: i32) -> (i32, i32) {
    %c0_i32 = arith.constant 0 : i32
    %c0_i32_0 = arith.constant 0 : i32
    return %arg0, %c0_i32 : i32, i32
  }
  func.func @transform_1(%arg0: i32) -> (i32, i32) {
    %c0_i32 = arith.constant 0 : i32
    %c0_i32_0 = arith.constant 0 : i32
    %c0_i32_1 = arith.constant 0 : i32
    return %c0_i32, %c0_i32_0 : i32, i32
  }
  func.func @transform_2(%arg0: i32) -> (i32, i32) {
    %c0_i32 = arith.constant 0 : i32
    %c0_i32_0 = arith.constant 0 : i32
    %c0_i32_1 = arith.constant 0 : i32
    return %c0_i32, %c0_i32_0 : i32, i32
  }
  func.func @transform_3(%arg0: i32) -> (i32, i32) {
    %c0_i32 = arith.constant 0 : i32
    %c0_i32_0 = arith.constant 0 : i32
    %c0_i32_1 = arith.constant 0 : i32
    return %c0_i32, %c0_i32_0 : i32, i32
  }
  func.func @transform_4(%arg0: i32) -> (i32, i32) {
    %c0_i32 = arith.constant 0 : i32
    %c0_i32_0 = arith.constant 0 : i32
    %c0_i32_1 = arith.constant 0 : i32
    return %c0_i32, %c0_i32_0 : i32, i32
  }
  func.func @transform_5(%arg0: i32) -> (i32, i32) {
    %c0_i32 = arith.constant 0 : i32
    %c0_i32_0 = arith.constant 0 : i32
    %c0_i32_1 = arith.constant 0 : i32
    return %c0_i32, %c0_i32_0 : i32, i32
  }
  func.func @transform_6(%arg0: i32) -> (i32, i32) {
    %c0_i32 = arith.constant 0 : i32
    %c0_i32_0 = arith.constant 0 : i32
    %c0_i32_1 = arith.constant 0 : i32
    return %c0_i32, %c0_i32_0 : i32, i32
  }
  func.func @transform_7(%arg0: i32) -> (i32, i32) {
    %c0_i32 = arith.constant 0 : i32
    %c0_i32_0 = arith.constant 0 : i32
    %c0_i32_1 = arith.constant 0 : i32
    return %c0_i32, %c0_i32_0 : i32, i32
  }
  func.func @transform_8(%arg0: i32) -> (i32, i32) {
    %c0_i32 = arith.constant 0 : i32
    %c0_i32_0 = arith.constant 0 : i32
    %c0_i32_1 = arith.constant 0 : i32
    return %c0_i32, %c0_i32_0 : i32, i32
  }
  func.func @transform_9(%arg0: i32) -> (i32, i32) {
    %c0_i32 = arith.constant 0 : i32
    %c0_i32_0 = arith.constant 0 : i32
    return %arg0, %c0_i32 : i32, i32
  }
}

</mosaic_0001>

<llo_original>
// kernel: tpu_custom_call.1
$region0: #{tpu_custom_call.1}
  #allocation0 [shape = 'u32[]', space=smem, size = 0x4, offset = 0x4, fixed_abs, tag = 'smem constant byte address 0x4 - core index']
  #allocation1 [shape = 'u32[144,128]{1,0:T(1,128)}', space=vmem, size = 0x12000, scoped, tag = 'internal scratch']
  %s0 = inlined_call_operand.vmem [shape: f32[100,32], index: 0, kind: input, shape index: {}]
  %s1 = inlined_call_operand.hbm [shape: bf16[32,128], index: 1, kind: input, shape index: {}]
  %s2 = inlined_call_operand.vmem [shape: f32[1,128], index: 2, kind: input, shape index: {}]
  %s3 = inlined_call_operand.vmem [shape: bf16[128,128], index: 3, kind: input, shape index: {}]
  %s4 = inlined_call_operand.vmem [shape: f32[1,128], index: 4, kind: input, shape index: {}]
  %s5 = inlined_call_operand.vmem [shape: bf16[128,128], index: 5, kind: input, shape index: {}]
  %s6 = inlined_call_operand.vmem [shape: f32[1,128], index: 6, kind: input, shape index: {}]
  %s7 = inlined_call_operand.hbm [shape: bf16[128,128], index: 7, kind: input, shape index: {}]
  %s8 = inlined_call_operand.vmem [shape: f32[1,128], index: 8, kind: input, shape index: {}]
  %s9 = inlined_call_operand.vmem [shape: f32[100,4], index: 9, kind: output, shape index: {}]
  %s10 = sld [smem:[#allocation0]]
  $region125: #{tpu_custom_call.1} parent=0
    _
  %s12 = ssub.s32 1, %s10
  %s13 = scalar_select 0, %s12, %s10
  $region1: #{tpu_custom_call.1} parent=0
    #allocation2 [shape = 'u8[8192]{0}', space=vmem, size = 0x2000, scoped, tag = 'input window, operand 1, single buffered']
    #allocation3 [shape = 's32[2]{0}', space=sflag, size = 0x8, scoped, tag = 'scoped memory for tpu_custom_call.1']
    #allocation4 [shape = 'u8[32768]{0}', space=vmem, size = 0x8000, scoped, tag = 'input window, operand 7, single buffered']
    #allocation5 [shape = 's32[1]{0}', space=sflag, size = 0x4, scoped, tag = 'scoped memory for tpu_custom_call.1']
    #allocation6 [shape = 'u8[32768]{0}', space=vmem, size = 0x8000, scoped, tag = 'output window, operand 0']
    %14 = vsyncpa [#allocation3], 0
    %15 = vsyncpa [#allocation5], 0
    loop: start=0, step=1, limit=6
    $region2: #{tpu_custom_call.1} parent=1 // loop_pre_header
      _
    $region3: #{tpu_custom_call.1} parent=1 // loop_header
      %s17 = sphi 0, %s21
      %p18 = scmp.ge.s32.totalorder %s17, 6
      %s27 = sphi 0, %s29
      %s30 = sphi 0, %s27
      %s31 = sphi 0, %s30
      %s47 = sphi 0, %s31
      %s51 = sphi 0, %s51
      %s53 = sphi 0, %s51
      %s54 = sphi 0, %s53
      %s68 = sphi 0, %s54
      %s72 = sphi 0, %s72
      %s74 = sphi 0, %s72
      %s75 = sphi 0, %s74
      %s89 = sphi 0, %s75
      %s93 = sphi 0, %s93
      %s95 = sphi 0, %s93
      %s96 = sphi 0, %s95
      %s110 = sphi 0, %s96
      %s114 = sphi 0, %s114
      %s116 = sphi 0, %s114
      %s117 = sphi 0, %s116
      %s131 = sphi 0, %s117
      %s135 = sphi 0, %s135
      %s137 = sphi 0, %s135
      %s138 = sphi 0, %s137
      %s152 = sphi 0, %s138
      %s156 = sphi 0, %s156
      %s158 = sphi 0, %s156
      %s159 = sphi 0, %s158
      %s173 = sphi 0, %s159
      %s177 = sphi 0, %s177
      %s179 = sphi 0, %s177
      %s180 = sphi 0, %s179
      %s194 = sphi 0, %s180
      %s198 = sphi 0, %s198
      %s200 = sphi 0, %s198
      %s201 = sphi 0, %s200
      %s215 = sphi 0, %s201
      %s221 = sphi 0, %s223
      %s224 = sphi 0, %s221
      %s225 = sphi 0, %s224
      %s241 = sphi 0, %s225
    $region4: #{tpu_custom_call.1} parent=1 // loop_header_branch
      %20 = sbr.rel (%p18) target = $region8
    $region5: #{tpu_custom_call.1} parent=1 // loop_body
      %s22 = ssub.s32 %s17, 1
      %s23 = ssub.s32 %s17, 2
      %s24 = sadd.s32 %s17, 1
      %s25 = ssub.s32 %s17, %s24
      %p26 = scmp.eq.s32.totalorder %s25, 0
      %s28 = sadd.s32 %s27, 1
      %s29 = scalar_select %p26, %s27, %s28
      %p32 = pneg %p26
      %p33 = scmp.eq.s32.totalorder %s17, 3
      %p34 = por %p32, %p33
      %p35 = scmp.ne.s32.totalorder %s27, %s30
      %p36 = scmp.eq.s32.totalorder %s17, 0
      %p37 = por %p35, %p36
      %p38 = scmp.ne.s32.totalorder %s27, %s30
      %p39 = scmp.eq.s32.totalorder %s22, 3
      %p40 = por %p38, %p39
      %p41 = scmp.ne.s32.totalorder %s30, %s31
      %p42 = scmp.eq.s32.totalorder %s22, 0
      %p43 = por %p41, %p42
      %p44 = scmp.ne.s32.totalorder %s30, %s31
      %p45 = scmp.eq.s32.totalorder %s23, 3
      %p46 = por %p44, %p45
      %p48 = scmp.ne.s32.totalorder %s31, %s47
      %p49 = scmp.eq.s32.totalorder %s23, 0
      %p50 = por %p48, %p49
      %s52 = sadd.s32 %s51, 1
      %p55 = scmp.eq.s32.totalorder %s17, 3
      %p56 = scmp.ne.s32.totalorder %s51, %s53
      %p57 = scmp.eq.s32.totalorder %s17, 0
      %p58 = por %p56, %p57
      %p59 = scmp.ne.s32.totalorder %s51, %s53
      %p60 = scmp.eq.s32.totalorder %s22, 3
      %p61 = por %p59, %p60
      %p62 = scmp.ne.s32.totalorder %s53, %s54
      %p63 = scmp.eq.s32.totalorder %s22, 0
      %p64 = por %p62, %p63
      %p65 = scmp.ne.s32.totalorder %s53, %s54
      %p66 = scmp.eq.s32.totalorder %s23, 3
      %p67 = por %p65, %p66
      %p69 = scmp.ne.s32.totalorder %s54, %s68
      %p70 = scmp.eq.s32.totalorder %s23, 0
      %p71 = por %p69, %p70
      %s73 = sadd.s32 %s72, 1
      %p76 = scmp.eq.s32.totalorder %s17, 3
      %p77 = scmp.ne.s32.totalorder %s72, %s74
      %p78 = scmp.eq.s32.totalorder %s17, 0
      %p79 = por %p77, %p78
      %p80 = scmp.ne.s32.totalorder %s72, %s74
      %p81 = scmp.eq.s32.totalorder %s22, 3
      %p82 = por %p80, %p81
      %p83 = scmp.ne.s32.totalorder %s74, %s75
      %p84 = scmp.eq.s32.totalorder %s22, 0
      %p85 = por %p83, %p84
      %p86 = scmp.ne.s32.totalorder %s74, %s75
      %p87 = scmp.eq.s32.totalorder %s23, 3
      %p88 = por %p86, %p87
      %p90 = scmp.ne.s32.totalorder %s75, %s89
      %p91 = scmp.eq.s32.totalorder %s23, 0
      %p92 = por %p90, %p91
      %s94 = sadd.s32 %s93, 1
      %p97 = scmp.eq.s32.totalorder %s17, 3
      %p98 = scmp.ne.s32.totalorder %s93, %s95
      %p99 = scmp.eq.s32.totalorder %s17, 0
      %p100 = por %p98, %p99
      %p101 = scmp.ne.s32.totalorder %s93, %s95
      %p102 = scmp.eq.s32.totalorder %s22, 3
      %p103 = por %p101, %p102
      %p104 = scmp.ne.s32.totalorder %s95, %s96
      %p105 = scmp.eq.s32.totalorder %s22, 0
      %p106 = por %p104, %p105
      %p107 = scmp.ne.s32.totalorder %s95, %s96
      %p108 = scmp.eq.s32.totalorder %s23, 3
      %p109 = por %p107, %p108
      %p111 = scmp.ne.s32.totalorder %s96, %s110
      %p112 = scmp.eq.s32.totalorder %s23, 0
      %p113 = por %p111, %p112
      %s115 = sadd.s32 %s114, 1
      %p118 = scmp.eq.s32.totalorder %s17, 3
      %p119 = scmp.ne.s32.totalorder %s114, %s116
      %p120 = scmp.eq.s32.totalorder %s17, 0
      %p121 = por %p119, %p120
      %p122 = scmp.ne.s32.totalorder %s114, %s116
      %p123 = scmp.eq.s32.totalorder %s22, 3
      %p124 = por %p122, %p123
      %p125 = scmp.ne.s32.totalorder %s116, %s117
      %p126 = scmp.eq.s32.totalorder %s22, 0
      %p127 = por %p125, %p126
      %p128 = scmp.ne.s32.totalorder %s116, %s117
      %p129 = scmp.eq.s32.totalorder %s23, 3
      %p130 = por %p128, %p129
      %p132 = scmp.ne.s32.totalorder %s117, %s131
      %p133 = scmp.eq.s32.totalorder %s23, 0
      %p134 = por %p132, %p133
      %s136 = sadd.s32 %s135, 1
      %p139 = scmp.eq.s32.totalorder %s17, 3
      %p140 = scmp.ne.s32.totalorder %s135, %s137
      %p141 = scmp.eq.s32.totalorder %s17, 0
      %p142 = por %p140, %p141
      %p143 = scmp.ne.s32.totalorder %s135, %s137
      %p144 = scmp.eq.s32.totalorder %s22, 3
      %p145 = por %p143, %p144
      %p146 = scmp.ne.s32.totalorder %s137, %s138
      %p147 = scmp.eq.s32.totalorder %s22, 0
      %p148 = por %p146, %p147
      %p149 = scmp.ne.s32.totalorder %s137, %s138
      %p150 = scmp.eq.s32.totalorder %s23, 3
      %p151 = por %p149, %p150
      %p153 = scmp.ne.s32.totalorder %s138, %s152
      %p154 = scmp.eq.s32.totalorder %s23, 0
      %p155 = por %p153, %p154
      %s157 = sadd.s32 %s156, 1
      %p160 = scmp.eq.s32.totalorder %s17, 3
      %p161 = scmp.ne.s32.totalorder %s156, %s158
      %p162 = scmp.eq.s32.totalorder %s17, 0
      %p163 = por %p161, %p162
      %p164 = scmp.ne.s32.totalorder %s156, %s158
      %p165 = scmp.eq.s32.totalorder %s22, 3
      %p166 = por %p164, %p165
      %p167 = scmp.ne.s32.totalorder %s158, %s159
      %p168 = scmp.eq.s32.totalorder %s22, 0
      %p169 = por %p167, %p168
      %p170 = scmp.ne.s32.totalorder %s158, %s159
      %p171 = scmp.eq.s32.totalorder %s23, 3
      %p172 = por %p170, %p171
      %p174 = scmp.ne.s32.totalorder %s159, %s173
      %p175 = scmp.eq.s32.totalorder %s23, 0
      %p176 = por %p174, %p175
      %s178 = sadd.s32 %s177, 1
      %p181 = scmp.eq.s32.totalorder %s17, 3
      %p182 = scmp.ne.s32.totalorder %s177, %s179
      %p183 = scmp.eq.s32.totalorder %s17, 0
      %p184 = por %p182, %p183
      %p185 = scmp.ne.s32.totalorder %s177, %s179
      %p186 = scmp.eq.s32.totalorder %s22, 3
      %p187 = por %p185, %p186
      %p188 = scmp.ne.s32.totalorder %s179, %s180
      %p189 = scmp.eq.s32.totalorder %s22, 0
      %p190 = por %p188, %p189
      %p191 = scmp.ne.s32.totalorder %s179, %s180
      %p192 = scmp.eq.s32.totalorder %s23, 3
      %p193 = por %p191, %p192
      %p195 = scmp.ne.s32.totalorder %s180, %s194
      %p196 = scmp.eq.s32.totalorder %s23, 0
      %p197 = por %p195, %p196
      %s199 = sadd.s32 %s198, 1
      %p202 = scmp.eq.s32.totalorder %s17, 3
      %p203 = scmp.ne.s32.totalorder %s198, %s200
      %p204 = scmp.eq.s32.totalorder %s17, 0
      %p205 = por %p203, %p204
      %p206 = scmp.ne.s32.totalorder %s198, %s200
      %p207 = scmp.eq.s32.totalorder %s22, 3
      %p208 = por %p206, %p207
      %p209 = scmp.ne.s32.totalorder %s200, %s201
      %p210 = scmp.eq.s32.totalorder %s22, 0
      %p211 = por %p209, %p210
      %p212 = scmp.ne.s32.totalorder %s200, %s201
      %p213 = scmp.eq.s32.totalorder %s23, 3
      %p214 = por %p212, %p213
      %p216 = scmp.ne.s32.totalorder %s201, %s215
      %p217 = scmp.eq.s32.totalorder %s23, 0
      %p218 = por %p216, %p217
      %s219 = ssub.s32 %s17, %s24
      %p220 = scmp.eq.s32.totalorder %s219, 0
      %s222 = sadd.s32 %s221, 1
      %s223 = scalar_select %p220, %s221, %s222
      %p226 = pneg %p220
      %p227 = scmp.eq.s32.totalorder %s17, 3
      %p228 = por %p226, %p227
      %p229 = scmp.ne.s32.totalorder %s221, %s224
      %p230 = scmp.eq.s32.totalorder %s17, 0
      %p231 = por %p229, %p230
      %p232 = scmp.ne.s32.totalorder %s221, %s224
      %p233 = scmp.eq.s32.totalorder %s22, 3
      %p234 = por %p232, %p233
      %p235 = scmp.ne.s32.totalorder %s224, %s225
      %p236 = scmp.eq.s32.totalorder %s22, 0
      %p237 = por %p235, %p236
      %p238 = scmp.ne.s32.totalorder %s224, %s225
      %p239 = scmp.eq.s32.totalorder %s23, 3
      %p240 = por %p238, %p239
      %p242 = scmp.ne.s32.totalorder %s225, %s241
      %p243 = scmp.eq.s32.totalorder %s23, 0
      %p244 = por %p242, %p243
      %p245 = scmp.le.s32.totalorder 1, %s17
      %p246 = scmp.lt.s32.totalorder %s17, 5
      %p247 = pnand %p245, %p246
      %p248 = pneg %p247
      // Predicated region
      $region9: #{tpu_custom_call.1} parent=5 // pred_check
        _
      $region10: #{tpu_custom_call.1} parent=5 // pred_check_branch
        %250 = sbr.rel (%p247) target = $region12
      $region11: #{tpu_custom_call.1} parent=5 // pred_region
        %s251 = ssub.s32 %s17, 1
        // Predicated region
        $region13: #{tpu_custom_call.1} parent=11 // pred_check
          %p252 = pneg %p64
        $region14: #{tpu_custom_call.1} parent=11 // pred_check_branch
          %254 = sbr.rel (%p252) target = $region16
        $region15: #{tpu_custom_call.1} parent=11 // pred_region
          %s256 = ssub.s32 256, 256
          %257 = vsyncadd [#allocation3], %s256
          %s258 = sshll.u32 [#allocation2], 4
          %s259 = int_to_ptr.vmem [resolvable:$true] %s258
          %264 = dma.hbm_to_vmem [thread:$0]  %s1, 256, %s259, [#allocation3], 64, 64, 4
        $region16: #{tpu_custom_call.1} parent=11 // pred_fallthru
          _
        // Predicated region
        $region17: #{tpu_custom_call.1} parent=11 // pred_check
          %p265 = pneg %p85
        $region18: #{tpu_custom_call.1} parent=11 // pred_check_branch
          %267 = sbr.rel (%p265) target = $region20
        $region19: #{tpu_custom_call.1} parent=11 // pred_region
          _
        $region20: #{tpu_custom_call.1} parent=11 // pred_fallthru
          _
        // Predicated region
        $region21: #{tpu_custom_call.1} parent=11 // pred_check
          %p268 = pneg %p106
        $region22: #{tpu_custom_call.1} parent=11 // pred_check_branch
          %270 = sbr.rel (%p268) target = $region24
        $region23: #{tpu_custom_call.1} parent=11 // pred_region
          _
        $region24: #{tpu_custom_call.1} parent=11 // pred_fallthru
          _
        // Predicated region
        $region25: #{tpu_custom_call.1} parent=11 // pred_check
          %p271 = pneg %p127
        $region26: #{tpu_custom_call.1} parent=11 // pred_check_branch
          %273 = sbr.rel (%p271) target = $region28
        $region27: #{tpu_custom_call.1} parent=11 // pred_region
          _
        $region28: #{tpu_custom_call.1} parent=11 // pred_fallthru
          _
        // Predicated region
        $region29: #{tpu_custom_call.1} parent=11 // pred_check
          %p274 = pneg %p148
        $region30: #{tpu_custom_call.1} parent=11 // pred_check_branch
          %276 = sbr.rel (%p274) target = $region32
        $region31: #{tpu_custom_call.1} parent=11 // pred_region
          _
        $region32: #{tpu_custom_call.1} parent=11 // pred_fallthru
          _
        // Predicated region
        $region33: #{tpu_custom_call.1} parent=11 // pred_check
          %p277 = pneg %p169
        $region34: #{tpu_custom_call.1} parent=11 // pred_check_branch
          %279 = sbr.rel (%p277) target = $region36
        $region35: #{tpu_custom_call.1} parent=11 // pred_region
          _
        $region36: #{tpu_custom_call.1} parent=11 // pred_fallthru
          _
        // Predicated region
        $region37: #{tpu_custom_call.1} parent=11 // pred_check
          %p280 = pneg %p190
        $region38: #{tpu_custom_call.1} parent=11 // pred_check_branch
          %282 = sbr.rel (%p280) target = $region40
        $region39: #{tpu_custom_call.1} parent=11 // pred_region
          %s284 = ssub.s32 1024, 1024
          %285 = vsyncadd [#allocation5], %s284
          %s286 = sshll.u32 [#allocation4], 4
          %s287 = int_to_ptr.vmem [resolvable:$true] %s286
          %292 = dma.hbm_to_vmem [thread:$0]  %s7, 1024, %s287, [#allocation5], 64, 64, 4
        $region40: #{tpu_custom_call.1} parent=11 // pred_fallthru
          _
        // Predicated region
        $region41: #{tpu_custom_call.1} parent=11 // pred_check
          %p293 = pneg %p211
        $region42: #{tpu_custom_call.1} parent=11 // pred_check_branch
          %295 = sbr.rel (%p293) target = $region44
        $region43: #{tpu_custom_call.1} parent=11 // pred_region
          _
        $region44: #{tpu_custom_call.1} parent=11 // pred_fallthru
          _
      $region12: #{tpu_custom_call.1} parent=5 // pred_fallthru
        _
      %p296 = scmp.lt.s32.totalorder %s17, 4
      // Predicated region
      $region45: #{tpu_custom_call.1} parent=5 // pred_check
        %p297 = pneg %p296
      $region46: #{tpu_custom_call.1} parent=5 // pred_check_branch
        %299 = sbr.rel (%p297) target = $region48
      $region47: #{tpu_custom_call.1} parent=5 // pred_region
        // Predicated region
        $region49: #{tpu_custom_call.1} parent=47 // pred_check
          %p300 = pneg %p37
        $region50: #{tpu_custom_call.1} parent=47 // pred_check_branch
          %302 = sbr.rel (%p300) target = $region52
        $region51: #{tpu_custom_call.1} parent=47 // pred_region
          %s303 = smul.u32 4, %s17
          %s304 = ssub.s32 13, %s303
          %p305 = scmp.lt.s32.totalorder %s304, 4
          %s306 = scalar_select %p305, %s304, 4
          %s307 = smul.u32 128, %s306
          %p308 = scmp.lt.s32.totalorder %s303, 12
          %s309 = scalar_select %p308, %s303, 12
          %s310 = smul.addr %s309, 8
          %s311 = scalar_lea.vmem %s0, %s310
          %s312 = smul.u32 4, %s17
          %s313 = ssub.s32 13, %s312
          %p314 = scmp.lt.s32.totalorder %s313, 4
          %s315 = scalar_select %p314, %s313, 4
          %s316 = smul.u32 128, %s315
        $region52: #{tpu_custom_call.1} parent=47 // pred_fallthru
          _
      $region48: #{tpu_custom_call.1} parent=5 // pred_fallthru
        _
      %p317 = scmp.le.s32.totalorder 1, %s17
      %p318 = scmp.lt.s32.totalorder %s17, 5
      %p319 = pnand %p317, %p318
      %p320 = pneg %p319
      // Predicated region
      $region53: #{tpu_custom_call.1} parent=5 // pred_check
        _
      $region54: #{tpu_custom_call.1} parent=5 // pred_check_branch
        %322 = sbr.rel (%p319) target = $region56
      $region55: #{tpu_custom_call.1} parent=5 // pred_region
        %s323 = ssub.s32 %s17, 1
        // Predicated region
        $region57: #{tpu_custom_call.1} parent=55 // pred_check
          %p324 = pneg %p64
        $region58: #{tpu_custom_call.1} parent=55 // pred_check_branch
          %326 = sbr.rel (%p324) target = $region60
        $region59: #{tpu_custom_call.1} parent=55 // pred_region
          %327 = dma.done [#allocation3], 256
        $region60: #{tpu_custom_call.1} parent=55 // pred_fallthru
          _
        // Predicated region
        $region61: #{tpu_custom_call.1} parent=55 // pred_check
          %p328 = pneg %p190
        $region62: #{tpu_custom_call.1} parent=55 // pred_check_branch
          %330 = sbr.rel (%p328) target = $region64
        $region63: #{tpu_custom_call.1} parent=55 // pred_region
          %331 = dma.done [#allocation5], 1024
        $region64: #{tpu_custom_call.1} parent=55 // pred_fallthru
          _
        %s332 = smul.u32 4, %s22
        %s333 = ssub.s32 13, %s332
        %p334 = scmp.lt.s32.totalorder %s333, 4
        %s335 = scalar_select %p334, %s333, 4
        %s336 = smul.u32 128, %s335
        %p337 = scmp.lt.s32.totalorder %s332, 12
        %s338 = scalar_select %p337, %s332, 12
        %s339 = smul.addr %s338, 8
        %s340 = scalar_lea.vmem %s0, %s339
        %p341 = pneg %p43
        %p342 = pneg %p40
        %p343 = pneg %p64
        %p344 = pneg %p61
        %p345 = pneg %p85
        %p346 = pneg %p82
        %p347 = pneg %p106
        %p348 = pneg %p103
        %p349 = pneg %p127
        %p350 = pneg %p124
        %p351 = pneg %p148
        %p352 = pneg %p145
        %p353 = pneg %p169
        %p354 = pneg %p166
        %p355 = pneg %p190
        %p356 = pneg %p187
        %p357 = pneg %p211
        %p358 = pneg %p208
        %p359 = pneg %p237
        %p360 = pneg %p234
        %s361 = sand.u32 %s224, 1
        %s362 = sand.u32 %s224, 1
        %s363 = smul.addr %s362, 32
        %s364 = scalar_lea.vmem [#allocation6], %s363
        %s365 = smul.u32 4, %s22
        %s366 = ssub.s32 13, %s365
        %p367 = scmp.lt.s32.totalorder %s366, 4
        %s368 = scalar_select %p367, %s366, 4
        %s369 = smul.u32 128, %s368
        %p370 = scmp.lt.s32.totalorder %s365, 12
        %s371 = scalar_select %p370, %s365, 12
        %s372 = smul.addr %s371, 8
        %s373 = scalar_lea.vmem %s0, %s372
        %s374 = smul.u32 4, %s22
        %s375 = ssub.s32 13, %s374
        %p376 = scmp.lt.s32.totalorder %s375, 4
        %s377 = scalar_select %p376, %s375, 4
        %s378 = smul.u32 128, %s377
        %s379 = smul.u32 4, %s22
        %s380 = ssub.s32 13, %s379
        %p381 = scmp.lt.s32.totalorder %s380, 4
        %s382 = scalar_select %p381, %s380, 4
        %s383 = smul.u32 128, %s382
        %v385 = vld [vmem:[%s373] sm:$0xff]
        %v386 = vld [vmem:[%s373 + $0x8] sm:$0xff]
        %v387 = vld [vmem:[%s373 + $0x10] sm:$0xff]
        %v388 = vld [vmem:[%s373 + $0x18] sm:$0xff]
        %v389 = vpack.c.bf16 %v386, %v385
        %v390 = vpack.c.bf16 %v388, %v387
        %v391 = vld [vmem:[#allocation2] sm:$0xf]
        %v392 = vld [vmem:[#allocation2 + $0x4] sm:$0xf]
        %v393 = vld [vmem:[#allocation2 + $0x8] sm:$0xf]
        %v394 = vld [vmem:[#allocation2 + $0xc] sm:$0xf]
        %v395 = vld [vmem:[%s2] sm:$0x1]
        %v397 = vlaneseq
        %v398 = vshrl.u32 %v397, 7
        %v399 = vsub.s32 0, %v398
        %v400 = vrot.slane %v395, %v399
        %v406 = vunpack.c.l.b16 %v391
        %v407 = vunpack.c.l.b16 %v392
        %v408 = vunpack.c.l.b16 %v393
        %v409 = vunpack.c.l.b16 %v394
        %v410 = vpack.c.b16 %v407, %v406
        %v411 = vpack.c.b16 %v409, %v408
        %vm414 = vcmask 261120
        %v416 = vsel %vm414, %v389, 0
        %v419 = vsel %vm414, %v390, 0
        %421 = vmatprep.subr.bf16.mxu0 0
        %422 = vmatpush1.bf16.msra.mxu0 %v410
        %423 = vmatprep.subr.bf16.mxu0 0
        %424 = vmatpush1.bf16.msra.mxu0 %v411
        %425 = vmatprep.subr.bf16.mxu0 0
        %426 = vmatpush1.bf16.msra.mxu0 0
        %427 = vmatprep.subr.bf16.mxu0 0
        %428 = vmatpush1.bf16.msra.mxu0 0
        %429 = vmatprep.subr.bf16.mxu0 0
        %430 = vmatpush1.bf16.msra.mxu0 0
        %431 = vmatprep.subr.bf16.mxu0 0
        %432 = vmatpush1.bf16.msra.mxu0 0
        %433 = vmatprep.subr.bf16.mxu0 0
        %434 = vmatpush1.bf16.msra.mxu0 0
        %435 = vmatprep.subr.bf16.mxu0 0
        %436 = vmatpush1.bf16.msra.mxu0 0
        %437 = vmatprep.subr.bf16.mxu0 0
        %438 = vmatpush1.bf16.msra.mxu0 0
        %439 = vmatprep.subr.bf16.mxu0 0
        %440 = vmatpush1.bf16.msra.mxu0 0
        %441 = vmatprep.subr.bf16.mxu0 0
        %442 = vmatpush1.bf16.msra.mxu0 0
        %443 = vmatprep.subr.bf16.mxu0 0
        %444 = vmatpush1.bf16.msra.mxu0 0
        %445 = vmatprep.subr.bf16.mxu0 0
        %446 = vmatpush1.bf16.msra.mxu0 0
        %447 = vmatprep.subr.bf16.mxu0 0
        %448 = vmatpush1.bf16.msra.mxu0 0
        %449 = vmatprep.subr.bf16.mxu0 0
        %450 = vmatpush1.bf16.msra.mxu0 0
        %451 = vmatprep.subr.bf16.mxu0 0
        %452 = vmatpush1.bf16.msra.mxu0 0
        %453 = vmatprep.mubr.bf16.mxu0 0
        %454 = vmatmul.mubr.bf16.gmra.mrb[0].mxu0 %v416
        %v455 = vpop.f32.mrb[0].mxu0
        %v456 = vadd.f32 %v400, %v455
        %v457 = vpop.f32.mrb[0].mxu0
        %v458 = vpop.f32.mrb[0].mxu0
        %v459 = vadd.f32 %v400, %v458
        %v460 = vpop.f32.mrb[0].mxu0
        %461 = vmatprep.mubr.bf16.mxu0 0
        %462 = vmatmul.mubr.bf16.gmra.mrb[0].mxu0 %v419
        %v463 = vpop.f32.mrb[0].mxu0
        %v464 = vadd.f32 %v400, %v463
        %v465 = vpop.f32.mrb[0].mxu0
        %v466 = vpop.f32.mrb[0].mxu0
        %v467 = vadd.f32 %v400, %v466
        %v468 = vpop.f32.mrb[0].mxu0
        %469 = vdwg.mxu0
        %v470 = vmax.f32 %v456, 0.0
        %v471 = vmax.f32 %v459, 0.0
        %v472 = vmax.f32 %v464, 0.0
        %v473 = vmax.f32 %v467, 0.0
        %v474 = vpack.c.bf16 %v471, %v470
        %v475 = vpack.c.bf16 %v473, %v472
        %v476 = vld [vmem:[%s3] sm:$0xf]
        %v477 = vld [vmem:[%s3 + $0x4] sm:$0xf]
        %v478 = vld [vmem:[%s3 + $0x8] sm:$0xf]
        %v479 = vld [vmem:[%s3 + $0xc] sm:$0xf]
        %v480 = vld [vmem:[%s3 + $0x10] sm:$0xf]
        %v481 = vld [vmem:[%s3 + $0x14] sm:$0xf]
        %v482 = vld [vmem:[%s3 + $0x18] sm:$0xf]
        %v483 = vld [vmem:[%s3 + $0x1c] sm:$0xf]
        %v484 = vld [vmem:[%s3 + $0x20] sm:$0xf]
        %v485 = vld [vmem:[%s3 + $0x24] sm:$0xf]
        %v486 = vld [vmem:[%s3 + $0x28] sm:$0xf]
        %v487 = vld [vmem:[%s3 + $0x2c] sm:$0xf]
        %v488 = vld [vmem:[%s3 + $0x30] sm:$0xf]
        %v489 = vld [vmem:[%s3 + $0x34] sm:$0xf]
        %v490 = vld [vmem:[%s3 + $0x38] sm:$0xf]
        %v491 = vld [vmem:[%s3 + $0x3c] sm:$0xf]
        %v492 = vld [vmem:[%s4] sm:$0x1]
        %v494 = vlaneseq
        %v495 = vshrl.u32 %v494, 7
        %v496 = vsub.s32 0, %v495
        %v497 = vrot.slane %v492, %v496
        %v515 = vunpack.c.l.b16 %v476
        %v516 = vunpack.c.l.b16 %v477
        %v517 = vunpack.c.l.b16 %v478
        %v518 = vunpack.c.l.b16 %v479
        %v519 = vunpack.c.l.b16 %v480
        %v520 = vunpack.c.l.b16 %v481
        %v521 = vunpack.c.l.b16 %v482
        %v522 = vunpack.c.l.b16 %v483
        %v523 = vunpack.c.l.b16 %v484
        %v524 = vunpack.c.l.b16 %v485
        %v525 = vunpack.c.l.b16 %v486
        %v526 = vunpack.c.l.b16 %v487
        %v527 = vunpack.c.l.b16 %v488
        %v528 = vunpack.c.l.b16 %v489
        %v529 = vunpack.c.l.b16 %v490
        %v530 = vunpack.c.l.b16 %v491
        %v531 = vpack.c.b16 %v516, %v515
        %v532 = vpack.c.b16 %v518, %v517
        %v533 = vpack.c.b16 %v520, %v519
        %v534 = vpack.c.b16 %v522, %v521
        %v535 = vpack.c.b16 %v524, %v523
        %v536 = vpack.c.b16 %v526, %v525
        %v537 = vpack.c.b16 %v528, %v527
        %v538 = vpack.c.b16 %v530, %v529
        %547 = vmatprep.subr.bf16.mxu0 0
        %548 = vmatpush1.bf16.msra.mxu0 %v531
        %549 = vmatprep.subr.bf16.mxu0 0
        %550 = vmatpush1.bf16.msra.mxu0 %v532
        %551 = vmatprep.subr.bf16.mxu0 0
        %552 = vmatpush1.bf16.msra.mxu0 %v533
        %553 = vmatprep.subr.bf16.mxu0 0
        %554 = vmatpush1.bf16.msra.mxu0 %v534
        %555 = vmatprep.subr.bf16.mxu0 0
        %556 = vmatpush1.bf16.msra.mxu0 %v535
        %557 = vmatprep.subr.bf16.mxu0 0
        %558 = vmatpush1.bf16.msra.mxu0 %v536
        %559 = vmatprep.subr.bf16.mxu0 0
        %560 = vmatpush1.bf16.msra.mxu0 %v537
        %561 = vmatprep.subr.bf16.mxu0 0
        %562 = vmatpush1.bf16.msra.mxu0 %v538
        %563 = vmatprep.subr.bf16.mxu0 0
        %564 = vmatpush1.bf16.msra.mxu0 0
        %565 = vmatprep.subr.bf16.mxu0 0
        %566 = vmatpush1.bf16.msra.mxu0 0
        %567 = vmatprep.subr.bf16.mxu0 0
        %568 = vmatpush1.bf16.msra.mxu0 0
        %569 = vmatprep.subr.bf16.mxu0 0
        %570 = vmatpush1.bf16.msra.mxu0 0
        %571 = vmatprep.subr.bf16.mxu0 0
        %572 = vmatpush1.bf16.msra.mxu0 0
        %573 = vmatprep.subr.bf16.mxu0 0
        %574 = vmatpush1.bf16.msra.mxu0 0
        %575 = vmatprep.subr.bf16.mxu0 0
        %576 = vmatpush1.bf16.msra.mxu0 0
        %577 = vmatprep.subr.bf16.mxu0 0
        %578 = vmatpush1.bf16.msra.mxu0 0
        %579 = vmatprep.mubr.bf16.mxu0 0
        %580 = vmatmul.mubr.bf16.gmra.mrb[0].mxu0 %v474
        %v581 = vpop.f32.mrb[0].mxu0
        %v582 = vadd.f32 %v497, %v581
        %v583 = vpop.f32.mrb[0].mxu0
        %v584 = vpop.f32.mrb[0].mxu0
        %v585 = vadd.f32 %v497, %v584
        %v586 = vpop.f32.mrb[0].mxu0
        %587 = vmatprep.mubr.bf16.mxu0 0
        %588 = vmatmul.mubr.bf16.gmra.mrb[0].mxu0 %v475
        %v589 = vpop.f32.mrb[0].mxu0
        %v590 = vadd.f32 %v497, %v589
        %v591 = vpop.f32.mrb[0].mxu0
        %v592 = vpop.f32.mrb[0].mxu0
        %v593 = vadd.f32 %v497, %v592
        %v594 = vpop.f32.mrb[0].mxu0
        %595 = vdwg.mxu0
        %v596 = vmax.f32 %v582, 0.0
        %v597 = vmax.f32 %v585, 0.0
        %v598 = vmax.f32 %v590, 0.0
        %v599 = vmax.f32 %v593, 0.0
        %v600 = vpack.c.bf16 %v597, %v596
        %v601 = vpack.c.bf16 %v599, %v598
        %v602 = vld [vmem:[%s5] sm:$0xf]
        %v603 = vld [vmem:[%s5 + $0x4] sm:$0xf]
        %v604 = vld [vmem:[%s5 + $0x8] sm:$0xf]
        %v605 = vld [vmem:[%s5 + $0xc] sm:$0xf]
        %v606 = vld [vmem:[%s5 + $0x10] sm:$0xf]
        %v607 = vld [vmem:[%s5 + $0x14] sm:$0xf]
        %v608 = vld [vmem:[%s5 + $0x18] sm:$0xf]
        %v609 = vld [vmem:[%s5 + $0x1c] sm:$0xf]
        %v610 = vld [vmem:[%s5 + $0x20] sm:$0xf]
        %v611 = vld [vmem:[%s5 + $0x24] sm:$0xf]
        %v612 = vld [vmem:[%s5 + $0x28] sm:$0xf]
        %v613 = vld [vmem:[%s5 + $0x2c] sm:$0xf]
        %v614 = vld [vmem:[%s5 + $0x30] sm:$0xf]
        %v615 = vld [vmem:[%s5 + $0x34] sm:$0xf]
        %v616 = vld [vmem:[%s5 + $0x38] sm:$0xf]
        %v617 = vld [vmem:[%s5 + $0x3c] sm:$0xf]
        %v618 = vld [vmem:[%s6] sm:$0x1]
        %v620 = vlaneseq
        %v621 = vshrl.u32 %v620, 7
        %v622 = vsub.s32 0, %v621
        %v623 = vrot.slane %v618, %v622
        %v641 = vunpack.c.l.b16 %v602
        %v642 = vunpack.c.l.b16 %v603
        %v643 = vunpack.c.l.b16 %v604
        %v644 = vunpack.c.l.b16 %v605
        %v645 = vunpack.c.l.b16 %v606
        %v646 = vunpack.c.l.b16 %v607
        %v647 = vunpack.c.l.b16 %v608
        %v648 = vunpack.c.l.b16 %v609
        %v649 = vunpack.c.l.b16 %v610
        %v650 = vunpack.c.l.b16 %v611
        %v651 = vunpack.c.l.b16 %v612
        %v652 = vunpack.c.l.b16 %v613
        %v653 = vunpack.c.l.b16 %v614
        %v654 = vunpack.c.l.b16 %v615
        %v655 = vunpack.c.l.b16 %v616
        %v656 = vunpack.c.l.b16 %v617
        %v657 = vpack.c.b16 %v642, %v641
        %v658 = vpack.c.b16 %v644, %v643
        %v659 = vpack.c.b16 %v646, %v645
        %v660 = vpack.c.b16 %v648, %v647
        %v661 = vpack.c.b16 %v650, %v649
        %v662 = vpack.c.b16 %v652, %v651
        %v663 = vpack.c.b16 %v654, %v653
        %v664 = vpack.c.b16 %v656, %v655
        %673 = vmatprep.subr.bf16.mxu0 0
        %674 = vmatpush1.bf16.msra.mxu0 %v657
        %675 = vmatprep.subr.bf16.mxu0 0
        %676 = vmatpush1.bf16.msra.mxu0 %v658
        %677 = vmatprep.subr.bf16.mxu0 0
        %678 = vmatpush1.bf16.msra.mxu0 %v659
        %679 = vmatprep.subr.bf16.mxu0 0
        %680 = vmatpush1.bf16.msra.mxu0 %v660
        %681 = vmatprep.subr.bf16.mxu0 0
        %682 = vmatpush1.bf16.msra.mxu0 %v661
        %683 = vmatprep.subr.bf16.mxu0 0
        %684 = vmatpush1.bf16.msra.mxu0 %v662
        %685 = vmatprep.subr.bf16.mxu0 0
        %686 = vmatpush1.bf16.msra.mxu0 %v663
        %687 = vmatprep.subr.bf16.mxu0 0
        %688 = vmatpush1.bf16.msra.mxu0 %v664
        %689 = vmatprep.subr.bf16.mxu0 0
        %690 = vmatpush1.bf16.msra.mxu0 0
        %691 = vmatprep.subr.bf16.mxu0 0
        %692 = vmatpush1.bf16.msra.mxu0 0
        %693 = vmatprep.subr.bf16.mxu0 0
        %694 = vmatpush1.bf16.msra.mxu0 0
        %695 = vmatprep.subr.bf16.mxu0 0
        %696 = vmatpush1.bf16.msra.mxu0 0
        %697 = vmatprep.subr.bf16.mxu0 0
        %698 = vmatpush1.bf16.msra.mxu0 0
        %699 = vmatprep.subr.bf16.mxu0 0
        %700 = vmatpush1.bf16.msra.mxu0 0
        %701 = vmatprep.subr.bf16.mxu0 0
        %702 = vmatpush1.bf16.msra.mxu0 0
        %703 = vmatprep.subr.bf16.mxu0 0
        %704 = vmatpush1.bf16.msra.mxu0 0
        %705 = vmatprep.mubr.bf16.mxu0 0
        %706 = vmatmul.mubr.bf16.gmra.mrb[0].mxu0 %v600
        %v707 = vpop.f32.mrb[0].mxu0
        %v708 = vadd.f32 %v623, %v707
        %v709 = vpop.f32.mrb[0].mxu0
        %v710 = vpop.f32.mrb[0].mxu0
        %v711 = vadd.f32 %v623, %v710
        %v712 = vpop.f32.mrb[0].mxu0
        %713 = vmatprep.mubr.bf16.mxu0 0
        %714 = vmatmul.mubr.bf16.gmra.mrb[0].mxu0 %v601
        %v715 = vpop.f32.mrb[0].mxu0
        %v716 = vadd.f32 %v623, %v715
        %v717 = vpop.f32.mrb[0].mxu0
        %v718 = vpop.f32.mrb[0].mxu0
        %v719 = vadd.f32 %v623, %v718
        %v720 = vpop.f32.mrb[0].mxu0
        %721 = vdwg.mxu0
        %v722 = vmax.f32 %v708, 0.0
        %v723 = vmax.f32 %v711, 0.0
        %v724 = vmax.f32 %v716, 0.0
        %v725 = vmax.f32 %v719, 0.0
        %v726 = vpack.c.bf16 %v723, %v722
        %v727 = vpack.c.bf16 %v725, %v724
        %v728 = vld [vmem:[#allocation4] sm:$0xf]
        %v729 = vld [vmem:[#allocation4 + $0x4] sm:$0xf]
        %v730 = vld [vmem:[#allocation4 + $0x8] sm:$0xf]
        %v731 = vld [vmem:[#allocation4 + $0xc] sm:$0xf]
        %v732 = vld [vmem:[#allocation4 + $0x10] sm:$0xf]
        %v733 = vld [vmem:[#allocation4 + $0x14] sm:$0xf]
        %v734 = vld [vmem:[#allocation4 + $0x18] sm:$0xf]
        %v735 = vld [vmem:[#allocation4 + $0x1c] sm:$0xf]
        %v736 = vld [vmem:[#allocation4 + $0x20] sm:$0xf]
        %v737 = vld [vmem:[#allocation4 + $0x24] sm:$0xf]
        %v738 = vld [vmem:[#allocation4 + $0x28] sm:$0xf]
        %v739 = vld [vmem:[#allocation4 + $0x2c] sm:$0xf]
        %v740 = vld [vmem:[#allocation4 + $0x30] sm:$0xf]
        %v741 = vld [vmem:[#allocation4 + $0x34] sm:$0xf]
        %v742 = vld [vmem:[#allocation4 + $0x38] sm:$0xf]
        %v743 = vld [vmem:[#allocation4 + $0x3c] sm:$0xf]
        %v744 = vld [vmem:[%s8] sm:$0x1]
        %v746 = vlaneseq
        %v747 = vshrl.u32 %v746, 7
        %v748 = vsub.s32 0, %v747
        %v749 = vrot.slane %v744, %v748
        %v767 = vunpack.c.l.b16 %v728
        %v768 = vunpack.c.l.b16 %v729
        %v769 = vunpack.c.l.b16 %v730
        %v770 = vunpack.c.l.b16 %v731
        %v771 = vunpack.c.l.b16 %v732
        %v772 = vunpack.c.l.b16 %v733
        %v773 = vunpack.c.l.b16 %v734
        %v774 = vunpack.c.l.b16 %v735
        %v775 = vunpack.c.l.b16 %v736
        %v776 = vunpack.c.l.b16 %v737
        %v777 = vunpack.c.l.b16 %v738
        %v778 = vunpack.c.l.b16 %v739
        %v779 = vunpack.c.l.b16 %v740
        %v780 = vunpack.c.l.b16 %v741
        %v781 = vunpack.c.l.b16 %v742
        %v782 = vunpack.c.l.b16 %v743
        %v783 = vpack.c.b16 %v768, %v767
        %v784 = vpack.c.b16 %v770, %v769
        %v785 = vpack.c.b16 %v772, %v771
        %v786 = vpack.c.b16 %v774, %v773
        %v787 = vpack.c.b16 %v776, %v775
        %v788 = vpack.c.b16 %v778, %v777
        %v789 = vpack.c.b16 %v780, %v779
        %v790 = vpack.c.b16 %v782, %v781
        %799 = vmatprep.subr.bf16.mxu0 0
        %800 = vmatpush1.bf16.msra.mxu0 %v783
        %801 = vmatprep.subr.bf16.mxu0 0
        %802 = vmatpush1.bf16.msra.mxu0 %v784
        %803 = vmatprep.subr.bf16.mxu0 0
        %804 = vmatpush1.bf16.msra.mxu0 %v785
        %805 = vmatprep.subr.bf16.mxu0 0
        %806 = vmatpush1.bf16.msra.mxu0 %v786
        %807 = vmatprep.subr.bf16.mxu0 0
        %808 = vmatpush1.bf16.msra.mxu0 %v787
        %809 = vmatprep.subr.bf16.mxu0 0
        %810 = vmatpush1.bf16.msra.mxu0 %v788
        %811 = vmatprep.subr.bf16.mxu0 0
        %812 = vmatpush1.bf16.msra.mxu0 %v789
        %813 = vmatprep.subr.bf16.mxu0 0
        %814 = vmatpush1.bf16.msra.mxu0 %v790
        %815 = vmatprep.subr.bf16.mxu0 0
        %816 = vmatpush1.bf16.msra.mxu0 0
        %817 = vmatprep.subr.bf16.mxu0 0
        %818 = vmatpush1.bf16.msra.mxu0 0
        %819 = vmatprep.subr.bf16.mxu0 0
        %820 = vmatpush1.bf16.msra.mxu0 0
        %821 = vmatprep.subr.bf16.mxu0 0
        %822 = vmatpush1.bf16.msra.mxu0 0
        %823 = vmatprep.subr.bf16.mxu0 0
        %824 = vmatpush1.bf16.msra.mxu0 0
        %825 = vmatprep.subr.bf16.mxu0 0
        %826 = vmatpush1.bf16.msra.mxu0 0
        %827 = vmatprep.subr.bf16.mxu0 0
        %828 = vmatpush1.bf16.msra.mxu0 0
        %829 = vmatprep.subr.bf16.mxu0 0
        %830 = vmatpush1.bf16.msra.mxu0 0
        %831 = vmatprep.mubr.bf16.mxu0 0
        %832 = vmatmul.mubr.bf16.gmra.mrb[0].mxu0 %v726
        %v833 = vpop.f32.mrb[0].mxu0
        %v834 = vadd.f32 %v749, %v833
        %v835 = vpop.f32.mrb[0].mxu0
        %v836 = vpop.f32.mrb[0].mxu0
        %v837 = vadd.f32 %v749, %v836
        %v838 = vpop.f32.mrb[0].mxu0
        %839 = vmatprep.mubr.bf16.mxu0 0
        %840 = vmatmul.mubr.bf16.gmra.mrb[0].mxu0 %v727
        %v841 = vpop.f32.mrb[0].mxu0
        %v842 = vadd.f32 %v749, %v841
        %v843 = vpop.f32.mrb[0].mxu0
        %v844 = vpop.f32.mrb[0].mxu0
        %v845 = vadd.f32 %v749, %v844
        %v846 = vpop.f32.mrb[0].mxu0
        %847 = vdwg.mxu0
        %v848 = vmax.f32 %v834, 0.0
        %v849 = vmax.f32 %v837, 0.0
        %v850 = vmax.f32 %v842, 0.0
        %v851 = vmax.f32 %v845, 0.0
        %vm852 = vcmask 31744
        %853 = vst.msk [vmem:[%s364] sm:$0xff] %vm852, %v848
        %854 = vst.msk [vmem:[%s364 + $0x8] sm:$0xff] %vm852, %v849
        %855 = vst.msk [vmem:[%s364 + $0x10] sm:$0xff] %vm852, %v850
        %856 = vst.msk [vmem:[%s364 + $0x18] sm:$0xff] %vm852, %v851
        %s857 = sand.u32 %s224, 1
        %s858 = sand.u32 %s224, 1
        %s859 = smul.addr %s858, 32
        %s860 = scalar_lea.vmem [#allocation6], %s859
        // Predicated region
        $region65: #{tpu_custom_call.1} parent=55 // pred_check
          %p861 = pneg %p234
        $region66: #{tpu_custom_call.1} parent=55 // pred_check_branch
          %863 = sbr.rel (%p861) target = $region68
        $region67: #{tpu_custom_call.1} parent=55 // pred_region
          %s864 = smul.u32 4, %s22
          %s865 = ssub.s32 13, %s864
          %p866 = scmp.lt.s32.totalorder %s865, 4
          %s867 = scalar_select %p866, %s865, 4
          %s868 = smul.u32 128, %s867
          %p869 = scmp.ne.s32.totalorder 0, %s868
          %s870 = smul.addr %s864, 8
          %s871 = scalar_lea.vmem %s9, %s870
          // Predicated region
          $region69: #{tpu_custom_call.1} parent=67 // pred_check
            %p872 = pneg %p869
          $region70: #{tpu_custom_call.1} parent=67 // pred_check_branch
            %874 = sbr.rel (%p872) target = $region72
          $region71: #{tpu_custom_call.1} parent=67 // pred_region
            // Predicated region
            $region73: #{tpu_custom_call.1} parent=71 // pred_check
              _
            $region74: #{tpu_custom_call.1} parent=71 // pred_check_branch
              %876 = sbr.rel (0) target = $region76
            $region75: #{tpu_custom_call.1} parent=71 // pred_region
              // Predicated region
              $region95: #{tpu_custom_call.1} parent=75 // pred_check
                _
              $region96: #{tpu_custom_call.1} parent=75 // pred_check_branch
                %931 = sbr.rel (0) target = $region98
              $region97: #{tpu_custom_call.1} parent=75 // pred_region
                %s932 = sshrl.u32 %s867, 2
                // While loop
                $region99: #{tpu_custom_call.1} parent=97 // loop_pre_header
                  _
                $region100: #{tpu_custom_call.1} parent=97 // loop_header
                  %s934 = sphi 0, %s936
                  %p935 = scmp.ge.s32.totalorder %s934, %s932
                  %s939 = sphi 0, %s952
                  %s940 = sphi %s860, %s955
                  %s941 = sphi %s871, %s956
                $region101: #{tpu_custom_call.1} parent=97 // loop_header_branch
                  %938 = sbr.rel (%p935) target = $region105
                $region102: #{tpu_custom_call.1} parent=97 // loop_body
                  %v942 = vld [vmem:[%s940] sm:$0xff]
                  %943 = vst [vmem:[%s941] sm:$0xff] %v942
                  %v944 = vld [vmem:[%s940 + $0x8] sm:$0xff]
                  %945 = vst [vmem:[%s941 + $0x8] sm:$0xff] %v944
                  %v946 = vld [vmem:[%s940 + $0x10] sm:$0xff]
                  %947 = vst [vmem:[%s941 + $0x10] sm:$0xff] %v946
                  %v948 = vld [vmem:[%s940 + $0x18] sm:$0xff]
                  %949 = vst [vmem:[%s941 + $0x18] sm:$0xff] %v948
                  %s950 = sadd.s32 1, %s939
                  %p951 = scmp.ge.s32.totalorder %s950, %s932
                  %s952 = scalar_select %p951, 0, %s950
                  %s953 = smul.u32 %s952, 32
                  %s954 = smul.u32 %s952, 32
                  %s955 = scalar_lea.vmem %s860, %s953 [#allocation6]
                  %s956 = scalar_lea.vmem %s871, %s954
                $region103: #{tpu_custom_call.1} parent=97 // loop_footer
                  %s936 = sadd.s32 %s934, 1
                $region104: #{tpu_custom_call.1} parent=97 // loop_footer_branch
                  %933 = sbr.rel target = $region100
                $region105: #{tpu_custom_call.1} parent=97 // loop_exit
                  _
                %s957 = sshrl.u32 %s867, 2
                %s958 = sand.u32 %s867, 3
                %s959 = smul.u32 %s957, 4
                %s960 = smul.u32 8, %s959
                %s961 = scalar_lea.vmem %s860, %s960 [#allocation6]
                %s962 = smul.u32 8, %s959
                %s963 = scalar_lea.vmem %s871, %s962
                // While loop
                $region106: #{tpu_custom_call.1} parent=97 // loop_pre_header
                  _
                $region107: #{tpu_custom_call.1} parent=97 // loop_header
                  %s965 = sphi 0, %s967
                  %p966 = scmp.ge.s32.totalorder %s965, %s958
                  %s970 = sphi 0, %s977
                  %s971 = sphi %s961, %s980
                  %s972 = sphi %s963, %s981
                $region108: #{tpu_custom_call.1} parent=97 // loop_header_branch
                  %969 = sbr.rel (%p966) target = $region112
                $region109: #{tpu_custom_call.1} parent=97 // loop_body
                  %v973 = vld [vmem:[%s971] sm:$0xff]
                  %974 = vst [vmem:[%s972] sm:$0xff] %v973
                  %s975 = sadd.s32 1, %s970
                  %p976 = scmp.ge.s32.totalorder %s975, %s958
                  %s977 = scalar_select %p976, 0, %s975
                  %s978 = smul.u32 %s977, 8
                  %s979 = smul.u32 %s977, 8
                  %s980 = scalar_lea.vmem %s961, %s978 [#allocation6]
                  %s981 = scalar_lea.vmem %s963, %s979
                $region110: #{tpu_custom_call.1} parent=97 // loop_footer
                  %s967 = sadd.s32 %s965, 1
                $region111: #{tpu_custom_call.1} parent=97 // loop_footer_branch
                  %964 = sbr.rel target = $region107
                $region112: #{tpu_custom_call.1} parent=97 // loop_exit
                  _
              $region98: #{tpu_custom_call.1} parent=75 // pred_fallthru
                _
              // Predicated region
              $region113: #{tpu_custom_call.1} parent=75 // pred_check
                _
              $region114: #{tpu_custom_call.1} parent=75 // pred_check_branch
                %983 = sbr.rel target = $region116
              $region115: #{tpu_custom_call.1} parent=75 // pred_region
                _
              $region116: #{tpu_custom_call.1} parent=75 // pred_fallthru
                _
            $region76: #{tpu_custom_call.1} parent=71 // pred_fallthru
              _
            // Predicated region
            $region77: #{tpu_custom_call.1} parent=71 // pred_check
              _
            $region78: #{tpu_custom_call.1} parent=71 // pred_check_branch
              %878 = sbr.rel target = $region80
            $region79: #{tpu_custom_call.1} parent=71 // pred_region
              %s880 = sshrl.u32 %s867, 2
              // While loop
              $region81: #{tpu_custom_call.1} parent=79 // loop_pre_header
                _
              $region82: #{tpu_custom_call.1} parent=79 // loop_header
                %s882 = sphi 0, %s884
                %p883 = scmp.ge.s32.totalorder %s882, %s880
                %s887 = sphi 0, %s900
                %s888 = sphi %s860, %s903
                %s889 = sphi %s871, %s904
              $region83: #{tpu_custom_call.1} parent=79 // loop_header_branch
                %886 = sbr.rel (%p883) target = $region87
              $region84: #{tpu_custom_call.1} parent=79 // loop_body
                %v890 = vld [vmem:[%s888] sm:$0xff]
                %891 = vst [vmem:[%s889] sm:$0xff] %v890
                %v892 = vld [vmem:[%s888 + $0x8] sm:$0xff]
                %893 = vst [vmem:[%s889 + $0x8] sm:$0xff] %v892
                %v894 = vld [vmem:[%s888 + $0x10] sm:$0xff]
                %895 = vst [vmem:[%s889 + $0x10] sm:$0xff] %v894
                %v896 = vld [vmem:[%s888 + $0x18] sm:$0xff]
                %897 = vst [vmem:[%s889 + $0x18] sm:$0xff] %v896
                %s898 = sadd.s32 1, %s887
                %p899 = scmp.ge.s32.totalorder %s898, %s880
                %s900 = scalar_select %p899, 0, %s898
                %s901 = smul.u32 %s900, 32
                %s902 = smul.u32 %s900, 32
                %s903 = scalar_lea.vmem %s860, %s901 [#allocation6]
                %s904 = scalar_lea.vmem %s871, %s902
              $region85: #{tpu_custom_call.1} parent=79 // loop_footer
                %s884 = sadd.s32 %s882, 1
              $region86: #{tpu_custom_call.1} parent=79 // loop_footer_branch
                %881 = sbr.rel target = $region82
              $region87: #{tpu_custom_call.1} parent=79 // loop_exit
                _
              %s905 = sshrl.u32 %s867, 2
              %s906 = sand.u32 %s867, 3
              %s907 = smul.u32 %s905, 4
              %s908 = smul.u32 8, %s907
              %s909 = scalar_lea.vmem %s860, %s908 [#allocation6]
              %s910 = smul.u32 8, %s907
              %s911 = scalar_lea.vmem %s871, %s910
              // While loop
              $region88: #{tpu_custom_call.1} parent=79 // loop_pre_header
                _
              $region89: #{tpu_custom_call.1} parent=79 // loop_header
                %s913 = sphi 0, %s915
                %p914 = scmp.ge.s32.totalorder %s913, %s906
                %s918 = sphi 0, %s925
                %s919 = sphi %s909, %s928
                %s920 = sphi %s911, %s929
              $region90: #{tpu_custom_call.1} parent=79 // loop_header_branch
                %917 = sbr.rel (%p914) target = $region94
              $region91: #{tpu_custom_call.1} parent=79 // loop_body
                %v921 = vld [vmem:[%s919] sm:$0xff]
                %922 = vst [vmem:[%s920] sm:$0xff] %v921
                %s923 = sadd.s32 1, %s918
                %p924 = scmp.ge.s32.totalorder %s923, %s906
                %s925 = scalar_select %p924, 0, %s923
                %s926 = smul.u32 %s925, 8
                %s927 = smul.u32 %s925, 8
                %s928 = scalar_lea.vmem %s909, %s926 [#allocation6]
                %s929 = scalar_lea.vmem %s911, %s927
              $region92: #{tpu_custom_call.1} parent=79 // loop_footer
                %s915 = sadd.s32 %s913, 1
              $region93: #{tpu_custom_call.1} parent=79 // loop_footer_branch
                %912 = sbr.rel target = $region89
              $region94: #{tpu_custom_call.1} parent=79 // loop_exit
                _
            $region80: #{tpu_custom_call.1} parent=71 // pred_fallthru
              _
          $region72: #{tpu_custom_call.1} parent=67 // pred_fallthru
            _
          %984 = vnop
        $region68: #{tpu_custom_call.1} parent=55 // pred_fallthru
          _
      $region56: #{tpu_custom_call.1} parent=5 // pred_fallthru
        _
      %p985 = scmp.le.s32.totalorder 2, %s17
      // Predicated region
      $region117: #{tpu_custom_call.1} parent=5 // pred_check
        %p986 = pneg %p985
      $region118: #{tpu_custom_call.1} parent=5 // pred_check_branch
        %988 = sbr.rel (%p986) target = $region120
      $region119: #{tpu_custom_call.1} parent=5 // pred_region
        %s989 = ssub.s32 %s17, 2
        // Predicated region
        $region121: #{tpu_custom_call.1} parent=119 // pred_check
          %p990 = pneg %p240
        $region122: #{tpu_custom_call.1} parent=119 // pred_check_branch
          %992 = sbr.rel (%p990) target = $region124
        $region123: #{tpu_custom_call.1} parent=119 // pred_region
          %s993 = sand.u32 %s225, 1
          %s994 = sand.u32 %s225, 1
          %s995 = smul.addr %s994, 32
          %s996 = scalar_lea.vmem [#allocation6], %s995
        $region124: #{tpu_custom_call.1} parent=119 // pred_fallthru
          _
      $region120: #{tpu_custom_call.1} parent=5 // pred_fallthru
        _
    $region6: #{tpu_custom_call.1} parent=1 // loop_footer
      %s21 = sadd.s32 1, %s17
    $region7: #{tpu_custom_call.1} parent=1 // loop_footer_branch
      %16 = sbr.rel target = $region3
    $region8: #{tpu_custom_call.1} parent=1 // loop_exit
      _
    %997 = vsyncpa [#allocation3], 1
    %s998 = scalar_lea.sflag [#allocation3], 1
    %999 = vsyncpa %s998, 1
    %1000 = vsyncpa [#allocation5], 1

</llo_original>
